<compile_context>
chip_gen: v7x
topology: tpu7x:2x2x1
jax: 0.10.0
libtpu: 0.0.40
codegen_flags: <defaults>
</compile_context>

<pallas_src>
import jax
import jax.numpy as jnp
from jax.experimental import pallas as pl
from jax.experimental.pallas import tpu as pltpu


def mlp_kernel(w1_ref, b1_ref, w2_ref, b2_ref, x_ref, o_ref):
    # x_ref: (5, TB) feature-major block; o_ref: (1, TB)
    # w1_ref: (10,) = (5,2) row-major flat; b1_ref: (2,); w2_ref: (2,); b2_ref: (1,)
    rows = [x_ref[k:k + 1, :] for k in range(5)]        # five (1, TB) lane-dense vectors

    # Hidden layer: h_j = sigmoid(b1[j] + sum_k x_k * w1[k, j])  -- unrolled VPU FMAs
    h = []
    for j in range(2):
        acc = rows[0] * w1_ref[0 * 2 + j] + b1_ref[j]
        for k in range(1, 5):
            acc = acc + rows[k] * w1_ref[k * 2 + j]
        h.append(jax.nn.sigmoid(acc))                   # EUP transcendental (free slot)

    # Output layer: y = sigmoid(b2 + sum_j h_j * w2[j])
    y = h[0] * w2_ref[0] + h[1] * w2_ref[1] + b2_ref[0]
    o_ref[...] = jax.nn.sigmoid(y)                      # lane-dense (1, TB) store


def mlp_forward(x, w1, b1, w2, b2):
    """x: (B, 5) f32; w1: (5, 2); b1: (2,); w2: (2,); b2: (1,). Returns (B, 1)."""
    B = x.shape[0]
    LANES = 128
    TB_MAX = 65536                                       # lane-dense tile cap (~1.25 MiB/block)
    tb = min(TB_MAX, ((B + LANES - 1) // LANES) * LANES)
    padded_B = ((B + tb - 1) // tb) * tb
    grid = (padded_B // tb,)

    # Wrapper-side layout plumbing: feature-major + lane padding.
    xt = jnp.pad(x.astype(jnp.float32).T, ((0, 0), (0, padded_B - B)))  # (5, padded_B)
    w1_flat = w1.reshape(-1).astype(jnp.float32)         # (10,) row-major of (5,2)
    b1_f = b1.reshape(-1).astype(jnp.float32)            # (2,)
    w2_f = w2.reshape(-1).astype(jnp.float32)            # (2,)
    b2_f = b2.reshape(-1).astype(jnp.float32)            # (1,)

    out = pl.pallas_call(
        mlp_kernel,
        out_shape=jax.ShapeDtypeStruct((1, padded_B), jnp.float32),
        grid_spec=pltpu.PrefetchScalarGridSpec(
            num_scalar_prefetch=0,
            grid=grid,
            in_specs=[
                pl.BlockSpec(memory_space=pltpu.MemorySpace.SMEM),   # w1 (scalars)
                pl.BlockSpec(memory_space=pltpu.MemorySpace.SMEM),   # b1
                pl.BlockSpec(memory_space=pltpu.MemorySpace.SMEM),   # w2
                pl.BlockSpec(memory_space=pltpu.MemorySpace.SMEM),   # b2
                pl.BlockSpec((5, tb), lambda i: (0, i)),             # x (feature-major)
            ],
            out_specs=pl.BlockSpec((1, tb), lambda i: (0, i)),
        ),
        compiler_params=pltpu.CompilerParams(
            dimension_semantics=("parallel",),           # shard batch grid across TCs (v7x)
        ),
        cost_estimate=pl.CostEstimate(
            flops=28 * padded_B,                         # ~14 MACs = 28 FLOPs per sample
            transcendentals=3 * padded_B,                # 3 sigmoids per sample
            bytes_accessed=24 * padded_B,                # 20 B in + 4 B out per sample
        ),
    )(w1_flat, b1_f, w2_f, b2_f, xt)

    return out[0, :B].reshape(B, 1)


def init_params(key):
    # Deterministic init mimicking PyTorch nn.Linear default:
    # U(-1/sqrt(fan_in), 1/sqrt(fan_in)) for both weight and bias.
    k1, k2, k3, k4 = jax.random.split(key, 4)
    bound1 = 1.0 / jnp.sqrt(5.0)
    bound2 = 1.0 / jnp.sqrt(2.0)
    # Stored as (in, out) = transpose of PyTorch's (out, in) layout.
    w1 = jax.random.uniform(k1, (5, 2), jnp.float32, -bound1, bound1)
    b1 = jax.random.uniform(k2, (2,), jnp.float32, -bound1, bound1)
    w2 = jax.random.uniform(k3, (2, 1), jnp.float32, -bound2, bound2)
    b2 = jax.random.uniform(k4, (1,), jnp.float32, -bound2, bound2)
    return w1, b1, w2, b2


if __name__ == "__main__":
    key = jax.random.PRNGKey(0)
    kx, kp = jax.random.split(key)
    B = 8
    x = jax.random.normal(kx, (B, 5), jnp.float32)
    w1, b1, w2, b2 = init_params(kp)

    out = mlp_forward(x, w1, b1, w2, b2)
    out = jax.block_until_ready(out)

    # Reference check in plain JAX
    ref = jax.nn.sigmoid(jax.nn.sigmoid(x @ w1 + b1) @ w2 + b2)
    assert out.shape == (B, 1)
    assert jnp.allclose(out, ref, atol=1e-5), "mismatch vs reference"
    print("KERNEL_OK")
</pallas_src>

<mosaic_0001>
module attributes {stable_mosaic.version = 11 : i64} {
  func.func @mlp_kernel(%arg0: i32, %arg1: memref<10xf32, #tpu.memory_space<smem>>, %arg2: memref<2xf32, #tpu.memory_space<smem>>, %arg3: memref<2xf32, #tpu.memory_space<smem>>, %arg4: memref<1xf32, #tpu.memory_space<smem>>, %arg5: memref<5x128xf32, #tpu.memory_space<vmem>>, %arg6: memref<1x128xf32, #tpu.memory_space<vmem>>) attributes {dimension_semantics = [#tpu.dimension_semantics<parallel>], iteration_bounds = array<i64: 1>, scalar_prefetch = 0 : i64, scratch_operands = 0 : i64, tpu.core_type = #tpu.core_type<tc>, window_params = [{transform_indices = @transform_0, window_bounds = array<i64: 10>}, {transform_indices = @transform_1, window_bounds = array<i64: 2>}, {transform_indices = @transform_2, window_bounds = array<i64: 2>}, {transform_indices = @transform_3, window_bounds = array<i64: 1>}, {transform_indices = @transform_4, window_bounds = array<i64: 5, 128>}, {transform_indices = @transform_5, window_bounds = array<i64: 1, 128>}]} {
    %c0 = arith.constant 0 : index
    %c0_0 = arith.constant 0 : index
    %0 = vector.load %arg5[%c0, %c0_0] : memref<5x128xf32, #tpu.memory_space<vmem>>, vector<1x128xf32>
    %c1 = arith.constant 1 : index
    %c0_1 = arith.constant 0 : index
    %1 = vector.load %arg5[%c1, %c0_1] : memref<5x128xf32, #tpu.memory_space<vmem>>, vector<1x128xf32>
    %c2 = arith.constant 2 : index
    %c0_2 = arith.constant 0 : index
    %2 = vector.load %arg5[%c2, %c0_2] : memref<5x128xf32, #tpu.memory_space<vmem>>, vector<1x128xf32>
    %c3 = arith.constant 3 : index
    %c0_3 = arith.constant 0 : index
    %3 = vector.load %arg5[%c3, %c0_3] : memref<5x128xf32, #tpu.memory_space<vmem>>, vector<1x128xf32>
    %c4 = arith.constant 4 : index
    %c0_4 = arith.constant 0 : index
    %4 = vector.load %arg5[%c4, %c0_4] : memref<5x128xf32, #tpu.memory_space<vmem>>, vector<1x128xf32>
    %c0_5 = arith.constant 0 : index
    %5 = memref.load %arg1[%c0_5] : memref<10xf32, #tpu.memory_space<smem>>
    %6 = vector.broadcast %5 : f32 to vector<1x128xf32>
    %7 = arith.mulf %0, %6 : vector<1x128xf32>
    %c0_6 = arith.constant 0 : index
    %8 = memref.load %arg2[%c0_6] : memref<2xf32, #tpu.memory_space<smem>>
    %9 = vector.broadcast %8 : f32 to vector<1x128xf32>
    %10 = arith.addf %7, %9 : vector<1x128xf32>
    %c2_7 = arith.constant 2 : index
    %11 = memref.load %arg1[%c2_7] : memref<10xf32, #tpu.memory_space<smem>>
    %12 = vector.broadcast %11 : f32 to vector<1x128xf32>
    %13 = arith.mulf %1, %12 : vector<1x128xf32>
    %14 = arith.addf %10, %13 : vector<1x128xf32>
    %c4_8 = arith.constant 4 : index
    %15 = memref.load %arg1[%c4_8] : memref<10xf32, #tpu.memory_space<smem>>
    %16 = vector.broadcast %15 : f32 to vector<1x128xf32>
    %17 = arith.mulf %2, %16 : vector<1x128xf32>
    %18 = arith.addf %14, %17 : vector<1x128xf32>
    %c6 = arith.constant 6 : index
    %19 = memref.load %arg1[%c6] : memref<10xf32, #tpu.memory_space<smem>>
    %20 = vector.broadcast %19 : f32 to vector<1x128xf32>
    %21 = arith.mulf %3, %20 : vector<1x128xf32>
    %22 = arith.addf %18, %21 : vector<1x128xf32>
    %c8 = arith.constant 8 : index
    %23 = memref.load %arg1[%c8] : memref<10xf32, #tpu.memory_space<smem>>
    %24 = vector.broadcast %23 : f32 to vector<1x128xf32>
    %25 = arith.mulf %4, %24 : vector<1x128xf32>
    %26 = arith.addf %22, %25 : vector<1x128xf32>
    %27 = arith.negf %26 : vector<1x128xf32>
    %28 = math.exp %27 : vector<1x128xf32>
    %cst = arith.constant 1.000000e+00 : f32
    %29 = vector.broadcast %cst : f32 to vector<1x128xf32>
    %30 = arith.addf %29, %28 : vector<1x128xf32>
    %31 = arith.divf %29, %30 : vector<1x128xf32>
    %c1_9 = arith.constant 1 : index
    %32 = memref.load %arg1[%c1_9] : memref<10xf32, #tpu.memory_space<smem>>
    %33 = vector.broadcast %32 : f32 to vector<1x128xf32>
    %34 = arith.mulf %0, %33 : vector<1x128xf32>
    %c1_10 = arith.constant 1 : index
    %35 = memref.load %arg2[%c1_10] : memref<2xf32, #tpu.memory_space<smem>>
    %36 = vector.broadcast %35 : f32 to vector<1x128xf32>
    %37 = arith.addf %34, %36 : vector<1x128xf32>
    %c3_11 = arith.constant 3 : index
    %38 = memref.load %arg1[%c3_11] : memref<10xf32, #tpu.memory_space<smem>>
    %39 = vector.broadcast %38 : f32 to vector<1x128xf32>
    %40 = arith.mulf %1, %39 : vector<1x128xf32>
    %41 = arith.addf %37, %40 : vector<1x128xf32>
    %c5 = arith.constant 5 : index
    %42 = memref.load %arg1[%c5] : memref<10xf32, #tpu.memory_space<smem>>
    %43 = vector.broadcast %42 : f32 to vector<1x128xf32>
    %44 = arith.mulf %2, %43 : vector<1x128xf32>
    %45 = arith.addf %41, %44 : vector<1x128xf32>
    %c7 = arith.constant 7 : index
    %46 = memref.load %arg1[%c7] : memref<10xf32, #tpu.memory_space<smem>>
    %47 = vector.broadcast %46 : f32 to vector<1x128xf32>
    %48 = arith.mulf %3, %47 : vector<1x128xf32>
    %49 = arith.addf %45, %48 : vector<1x128xf32>
    %c9 = arith.constant 9 : index
    %50 = memref.load %arg1[%c9] : memref<10xf32, #tpu.memory_space<smem>>
    %51 = vector.broadcast %50 : f32 to vector<1x128xf32>
    %52 = arith.mulf %4, %51 : vector<1x128xf32>
    %53 = arith.addf %49, %52 : vector<1x128xf32>
    %54 = arith.negf %53 : vector<1x128xf32>
    %55 = math.exp %54 : vector<1x128xf32>
    %cst_12 = arith.constant 1.000000e+00 : f32
    %56 = vector.broadcast %cst_12 : f32 to vector<1x128xf32>
    %57 = arith.addf %56, %55 : vector<1x128xf32>
    %58 = arith.divf %56, %57 : vector<1x128xf32>
    %c0_13 = arith.constant 0 : index
    %59 = memref.load %arg3[%c0_13] : memref<2xf32, #tpu.memory_space<smem>>
    %60 = vector.broadcast %59 : f32 to vector<1x128xf32>
    %61 = arith.mulf %31, %60 : vector<1x128xf32>
    %c1_14 = arith.constant 1 : index
    %62 = memref.load %arg3[%c1_14] : memref<2xf32, #tpu.memory_space<smem>>
    %63 = vector.broadcast %62 : f32 to vector<1x128xf32>
    %64 = arith.mulf %58, %63 : vector<1x128xf32>
    %65 = arith.addf %61, %64 : vector<1x128xf32>
    %c0_15 = arith.constant 0 : index
    %66 = memref.load %arg4[%c0_15] : memref<1xf32, #tpu.memory_space<smem>>
    %67 = vector.broadcast %66 : f32 to vector<1x128xf32>
    %68 = arith.addf %65, %67 : vector<1x128xf32>
    %69 = arith.negf %68 : vector<1x128xf32>
    %70 = math.exp %69 : vector<1x128xf32>
    %cst_16 = arith.constant 1.000000e+00 : f32
    %71 = vector.broadcast %cst_16 : f32 to vector<1x128xf32>
    %72 = arith.addf %71, %70 : vector<1x128xf32>
    %73 = arith.divf %71, %72 : vector<1x128xf32>
    %c0_17 = arith.constant 0 : index
    %c0_18 = arith.constant 0 : index
    %74 = vector.load %arg6[%c0_17, %c0_18] : memref<1x128xf32, #tpu.memory_space<vmem>>, vector<1x128xf32>
    tpu.vector_store %arg6[%c0_17, %c0_18], %73 {strides = array<i32>} : memref<1x128xf32, #tpu.memory_space<vmem>>, vector<1x128xf32>,
    return
  }
  func.func @transform_0(%arg0: i32) -> i32 {
    %c0_i32 = arith.constant 0 : i32
    %c0_i32_0 = arith.constant 0 : i32
    return %c0_i32 : i32
  }
  func.func @transform_1(%arg0: i32) -> i32 {
    %c0_i32 = arith.constant 0 : i32
    %c0_i32_0 = arith.constant 0 : i32
    return %c0_i32 : i32
  }
  func.func @transform_2(%arg0: i32) -> i32 {
    %c0_i32 = arith.constant 0 : i32
    %c0_i32_0 = arith.constant 0 : i32
    return %c0_i32 : i32
  }
  func.func @transform_3(%arg0: i32) -> i32 {
    %c0_i32 = arith.constant 0 : i32
    %c0_i32_0 = arith.constant 0 : i32
    return %c0_i32 : i32
  }
  func.func @transform_4(%arg0: i32) -> (i32, i32) {
    %c0_i32 = arith.constant 0 : i32
    %c0_i32_0 = arith.constant 0 : i32
    return %c0_i32, %arg0 : i32, i32
  }
  func.func @transform_5(%arg0: i32) -> (i32, i32) {
    %c0_i32 = arith.constant 0 : i32
    %c0_i32_0 = arith.constant 0 : i32
    return %c0_i32, %arg0 : i32, i32
  }
}

</mosaic_0001>

<llo_original>
// kernel: tpu_custom_call.1
$region0: #{tpu_custom_call.1}
  #allocation0 [shape = 'u32[]', space=smem, size = 0x4, offset = 0x4, fixed_abs, tag = 'smem constant byte address 0x4 - core index']
  #allocation1 [shape = 'u32[144,128]{1,0:T(1,128)}', space=vmem, size = 0x12000, scoped, tag = 'internal scratch']
  #allocation2 [shape = 'f32[1]{0:T(128)S(6)}', space=smem, size = 0x200, scoped, tag = 'scoped memory for tpu_custom_call.1']
  %s0 = inlined_call_operand.vmem [shape: f32[10], index: 0, kind: input, shape index: {}]
  %s1 = inlined_call_operand.vmem [shape: f32[2], index: 1, kind: input, shape index: {}]
  %s2 = inlined_call_operand.vmem [shape: f32[2], index: 2, kind: input, shape index: {}]
  %s3 = inlined_call_operand.<no memory space> [shape: f32[1], index: 3, kind: input, shape index: {}]
  %s4 = inlined_call_operand.vmem [shape: f32[5,128], index: 4, kind: input, shape index: {}]
  %s5 = inlined_call_operand.hbm [shape: f32[1,128], index: 5, kind: output, shape index: {}]
  %s6 = sld [smem:[#allocation0]]
  $region42: #{tpu_custom_call.1} parent=0
    _
  %s8 = ssub.s32 1, %s6
  %s9 = scalar_select 0, %s8, %s6
  %10 = sst [smem:[#allocation2]] %s3
  $region1: #{tpu_custom_call.1} parent=0
    #allocation3 [shape = 'u8[512]{0}', space=smem, size = 0x200, scoped, tag = 'input window, operand 0, single buffered']
    #allocation4 [shape = 's32[1]{0}', space=sflag, size = 0x4, scoped, tag = 'scoped memory for tpu_custom_call.1']
    #allocation5 [shape = 's32[1]{0}', space=sflag, size = 0x4, scoped, tag = 'scoped memory for tpu_custom_call.1']
    #allocation6 [shape = 'u8[512]{0}', space=smem, size = 0x200, scoped, tag = 'input window, operand 1, single buffered']
    #allocation7 [shape = 's32[1]{0}', space=sflag, size = 0x4, scoped, tag = 'scoped memory for tpu_custom_call.1']
    #allocation8 [shape = 'u8[512]{0}', space=smem, size = 0x200, scoped, tag = 'input window, operand 2, single buffered']
    #allocation9 [shape = 'u8[512]{0}', space=vmem, size = 0x400, scoped, tag = 'output window, operand 0, single buffered']
    %11 = vsyncpa [#allocation5], 0
    %12 = vsyncpa [#allocation7], 0
    %13 = vsyncpa [#allocation4], 0
    // Predicated region
    $region2: #{tpu_custom_call.1} parent=1 // pred_check
      _
    $region3: #{tpu_custom_call.1} parent=1 // pred_check_branch
      %15 = sbr.rel (0) target = $region5
    $region4: #{tpu_custom_call.1} parent=1 // pred_region
      %s17 = ssub.s32 16, 16
      %18 = vsyncadd [#allocation5], %s17
      %s20 = sshll.u32 %s0, 4
      %s21 = int_to_ptr.vmem [resolvable:$true] %s20
      %23 = dma.vmem_to_smem %s21, 16, [#allocation3], [#allocation5]
    $region5: #{tpu_custom_call.1} parent=1 // pred_fallthru
      _
    // Predicated region
    $region6: #{tpu_custom_call.1} parent=1 // pred_check
      _
    $region7: #{tpu_custom_call.1} parent=1 // pred_check_branch
      %25 = sbr.rel (0) target = $region9
    $region8: #{tpu_custom_call.1} parent=1 // pred_region
      %s27 = ssub.s32 16, 16
      %28 = vsyncadd [#allocation7], %s27
      %s30 = sshll.u32 %s1, 4
      %s31 = int_to_ptr.vmem [resolvable:$true] %s30
      %33 = dma.vmem_to_smem %s31, 16, [#allocation6], [#allocation7]
    $region9: #{tpu_custom_call.1} parent=1 // pred_fallthru
      _
    // Predicated region
    $region10: #{tpu_custom_call.1} parent=1 // pred_check
      _
    $region11: #{tpu_custom_call.1} parent=1 // pred_check_branch
      %35 = sbr.rel (0) target = $region13
    $region12: #{tpu_custom_call.1} parent=1 // pred_region
      %s37 = ssub.s32 16, 16
      %38 = vsyncadd [#allocation7], %s37
      %s40 = sshll.u32 %s2, 4
      %s41 = int_to_ptr.vmem [resolvable:$true] %s40
      %43 = dma.vmem_to_smem %s41, 16, [#allocation8], [#allocation7]
    $region13: #{tpu_custom_call.1} parent=1 // pred_fallthru
      _
    // Predicated region
    $region14: #{tpu_custom_call.1} parent=1 // pred_check
      _
    $region15: #{tpu_custom_call.1} parent=1 // pred_check_branch
      %45 = sbr.rel (0) target = $region17
    $region16: #{tpu_custom_call.1} parent=1 // pred_region
      _
    $region17: #{tpu_custom_call.1} parent=1 // pred_fallthru
      _
    // Predicated region
    $region18: #{tpu_custom_call.1} parent=1 // pred_check
      _
    $region19: #{tpu_custom_call.1} parent=1 // pred_check_branch
      %47 = sbr.rel (0) target = $region21
    $region20: #{tpu_custom_call.1} parent=1 // pred_region
      _
    $region21: #{tpu_custom_call.1} parent=1 // pred_fallthru
      _
    // Predicated region
    $region22: #{tpu_custom_call.1} parent=1 // pred_check
      _
    $region23: #{tpu_custom_call.1} parent=1 // pred_check_branch
      %49 = sbr.rel (0) target = $region25
    $region24: #{tpu_custom_call.1} parent=1 // pred_region
      %50 = dma.done [#allocation5], 16
    $region25: #{tpu_custom_call.1} parent=1 // pred_fallthru
      _
    // Predicated region
    $region26: #{tpu_custom_call.1} parent=1 // pred_check
      _
    $region27: #{tpu_custom_call.1} parent=1 // pred_check_branch
      %52 = sbr.rel (0) target = $region29
    $region28: #{tpu_custom_call.1} parent=1 // pred_region
      %53 = dma.done [#allocation7], 16
    $region29: #{tpu_custom_call.1} parent=1 // pred_fallthru
      _
    // Predicated region
    $region30: #{tpu_custom_call.1} parent=1 // pred_check
      _
    $region31: #{tpu_custom_call.1} parent=1 // pred_check_branch
      %55 = sbr.rel (0) target = $region33
    $region32: #{tpu_custom_call.1} parent=1 // pred_region
      %56 = dma.done [#allocation7], 16
    $region33: #{tpu_custom_call.1} parent=1 // pred_fallthru
      _
    %57 = sfence
    %v58 = vld [vmem:[%s4] sm:$0x1]
    %v59 = vld [vmem:[%s4 + $0x1] sm:$0x1]
    %v60 = vld [vmem:[%s4 + $0x2] sm:$0x1]
    %v61 = vld [vmem:[%s4 + $0x3] sm:$0x1]
    %v62 = vld [vmem:[%s4 + $0x4] sm:$0x1]
    %s63 = sld [smem:[#allocation3]]
    %v64 = vstv %s63
    %v65 = vmul.f32 %v58, %v64
    %s66 = sld [smem:[#allocation6]]
    %v67 = vstv %s66
    %v68 = vadd.f32 %v65, %v67
    %s69 = sld [smem:[#allocation3 + $0x2]]
    %v70 = vstv %s69
    %v71 = vmul.f32 %v59, %v70
    %v72 = vadd.f32 %v68, %v71
    %s73 = sld [smem:[#allocation3 + $0x4]]
    %v74 = vstv %s73
    %v75 = vmul.f32 %v60, %v74
    %v76 = vadd.f32 %v72, %v75
    %s77 = sld [smem:[#allocation3 + $0x6]]
    %v78 = vstv %s77
    %v79 = vmul.f32 %v61, %v78
    %v80 = vadd.f32 %v76, %v79
    %s81 = sld [smem:[#allocation3 + $0x8]]
    %v82 = vstv %s81
    %v83 = vmul.f32 %v62, %v82
    %v84 = vadd.f32 %v80, %v83
    %v85 = vxor.u32 %v84, 2147483648
    %v86 = vmul.f32 %v85, 1.442695
    %v87 = vpow.pop %v86
    %v88 = vadd.f32 %v87, 1.0
    %v89 = vrcp.pop %v88
    %v90 = vmul.f32 1.0, %v89
    %s91 = sld [smem:[#allocation3 + $0x1]]
    %v92 = vstv %s91
    %v93 = vmul.f32 %v58, %v92
    %s94 = sld [smem:[#allocation6 + $0x1]]
    %v95 = vstv %s94
    %v96 = vadd.f32 %v93, %v95
    %s97 = sld [smem:[#allocation3 + $0x3]]
    %v98 = vstv %s97
    %v99 = vmul.f32 %v59, %v98
    %v100 = vadd.f32 %v96, %v99
    %s101 = sld [smem:[#allocation3 + $0x5]]
    %v102 = vstv %s101
    %v103 = vmul.f32 %v60, %v102
    %v104 = vadd.f32 %v100, %v103
    %s105 = sld [smem:[#allocation3 + $0x7]]
    %v106 = vstv %s105
    %v107 = vmul.f32 %v61, %v106
    %v108 = vadd.f32 %v104, %v107
    %s109 = sld [smem:[#allocation3 + $0x9]]
    %v110 = vstv %s109
    %v111 = vmul.f32 %v62, %v110
    %v112 = vadd.f32 %v108, %v111
    %v113 = vxor.u32 %v112, 2147483648
    %v114 = vmul.f32 %v113, 1.442695
    %v115 = vpow.pop %v114
    %v116 = vadd.f32 %v115, 1.0
    %v117 = vrcp.pop %v116
    %v118 = vmul.f32 1.0, %v117
    %s119 = sld [smem:[#allocation8]]
    %v120 = vstv %s119
    %v121 = vmul.f32 %v90, %v120
    %s122 = sld [smem:[#allocation8 + $0x1]]
    %v123 = vstv %s122
    %v124 = vmul.f32 %v118, %v123
    %v125 = vadd.f32 %v121, %v124
    %s126 = sld [smem:[#allocation2]]
    %v127 = vstv %s126
    %v128 = vadd.f32 %v125, %v127
    %v129 = vxor.u32 %v128, 2147483648
    %v130 = vmul.f32 %v129, 1.442695
    %v131 = vpow.pop %v130
    %v132 = vadd.f32 %v131, 1.0
    %v133 = vrcp.pop %v132
    %v134 = vmul.f32 1.0, %v133
    %135 = vst [vmem:[#allocation9] sm:$0x1] %v134
    // Predicated region
    $region34: #{tpu_custom_call.1} parent=1 // pred_check
      _
    $region35: #{tpu_custom_call.1} parent=1 // pred_check_branch
      %137 = sbr.rel (0) target = $region37
    $region36: #{tpu_custom_call.1} parent=1 // pred_region
      %s139 = ssub.s32 16, 16
      %140 = vsyncadd [#allocation4], %s139
      %s142 = sshll.u32 [#allocation9], 4
      %s143 = int_to_ptr.vmem [resolvable:$true] %s142
      %145 = dma.vmem_to_hbm [thread:$0]  %s143, 16, %s5, [#allocation4]
    $region37: #{tpu_custom_call.1} parent=1 // pred_fallthru
      _
    // Predicated region
    $region38: #{tpu_custom_call.1} parent=1 // pred_check
      _
    $region39: #{tpu_custom_call.1} parent=1 // pred_check_branch
      %147 = sbr.rel (0) target = $region41
    $region40: #{tpu_custom_call.1} parent=1 // pred_region
      %148 = dma.done [#allocation4], 16
    $region41: #{tpu_custom_call.1} parent=1 // pred_fallthru
      _
    %149 = vsyncpa [#allocation4], 1
    %150 = vsyncpa [#allocation5], 1
    %151 = vsyncpa [#allocation7], 1

</llo_original>
